<compile_context>
chip_gen: v7x
topology: tpu7x:2x2x1
jax: 0.10.0
libtpu: 0.0.40
codegen_flags: <defaults>
</compile_context>

<pallas_src>
import numpy as np
import jax
import jax.numpy as jnp
from jax.experimental import pallas as pl
from jax.experimental.pallas import tpu as pltpu


def _round_up(x, m):
    return ((x + m - 1) // m) * m


def _make_hidden_kernel(num_hidden_layers):
    """Hidden MLP (+ folded BatchNorm + LeakyReLU) over the FULL batch.

    Ref order: x (B, in0_p) bf16,
               layer 0      : w bf16, b f32
               layer i >= 1 : w bf16, b f32, gamma f32, beta f32
               out h (B, d_last_p) bf16
    """

    def kernel(*refs):
        x_ref = refs[0]
        out_ref = refs[-1]
        params = refs[1:-1]

        h = x_ref[...]                      # bf16
        idx = 0
        for layer in range(num_hidden_layers):
            w = params[idx][...]            # bf16 (d_in_p, d_out_p)
            b = params[idx + 1][...]        # f32  (1, d_out_p)
            idx += 2
            h32 = jnp.dot(h, w, preferred_element_type=jnp.float32) + b
            if layer > 0:
                gamma = params[idx][...]
                beta = params[idx + 1][...]
                idx += 2
                # BatchNorm1d(d, eps=0.8), training mode, biased batch stats.
                # Single pass: sum and sum-of-squares, folded to scale/shift.
                inv_n = 1.0 / h32.shape[0]
                s1 = jnp.sum(h32, axis=0, keepdims=True)
                s2 = jnp.sum(h32 * h32, axis=0, keepdims=True)
                mean = s1 * inv_n
                var = s2 * inv_n - mean * mean
                scale = gamma * jax.lax.rsqrt(var + 0.8)
                shift = beta - mean * scale
                h32 = h32 * scale + shift
            # LeakyReLU(0.2): max(x, 0.2 x) (slope < 1 so this is exact).
            h32 = jnp.maximum(h32, 0.2 * h32)
            h = h32.astype(jnp.bfloat16)
        out_ref[...] = h

    return kernel


def _fc_kernel(h_ref, w_ref, b_ref, o_ref):
    """fc column/batch tile: (TB, K)bf16 @ (K, TN)bf16 -> f32 -> +b -> tanh."""
    acc = jnp.dot(h_ref[...], w_ref[...], preferred_element_type=jnp.float32)
    o_ref[...] = jnp.tanh(acc + b_ref[...])


class Generator:
    """JAX/Pallas port of the PyTorch cGAN Generator (forward only)."""

    def __init__(self, img_shape, num_class, dim_latent,
                 g_dims=(128, 256, 512, 1024), key=None):
        self.img_shape = tuple(int(s) for s in img_shape)
        self.num_class = int(num_class)
        self.dim_latent = int(dim_latent)
        self.g_dims = tuple(int(d) for d in g_dims)
        self.img_flat = int(np.prod(self.img_shape))
        self.n_layers = len(self.g_dims)

        if key is None:
            key = jax.random.PRNGKey(0)

        in_feat0 = self.dim_latent + self.num_class
        feats = [in_feat0] + list(self.g_dims) + [self.img_flat]

        # Padded (lane-aligned) widths:
        #   intermediates -> x128 ; last hidden (fc K) -> x256 (v6e/v7x MXU);
        #   img_flat (fc N) -> x512 so column tiles are never slivers.
        feats_p = []
        for idx, f in enumerate(feats):
            if idx == len(feats) - 1:
                feats_p.append(_round_up(f, 512))
            elif idx == len(feats) - 2:
                feats_p.append(_round_up(f, 256))
            else:
                feats_p.append(_round_up(f, 128))
        self.feats_p = feats_p
        self.in0_p = feats_p[0]
        self.d_last_p = feats_p[-2]
        self.img_flat_p = feats_p[-1]
        self.hidden_widths_p = feats_p[1:-1]

        # Deterministic PyTorch-style init: U(-1/sqrt(fan_in), 1/sqrt(fan_in))
        # using the REAL (unpadded) fan_in. Weights stored pre-transposed as
        # (in, out) bf16, embedded in zero-padded lane-aligned arrays.
        self.hidden_params = []     # flat list in kernel order
        self.fc_w = None
        self.fc_b = None
        for i in range(self.n_layers + 1):
            fi, fo = feats[i], feats[i + 1]
            fip, fop = feats_p[i], feats_p[i + 1]
            key, kw, kb = jax.random.split(key, 3)
            bound = 1.0 / np.sqrt(fi)
            w = jax.random.uniform(kw, (fi, fo), jnp.float32, -bound, bound)
            b = jax.random.uniform(kb, (fo,), jnp.float32, -bound, bound)
            w_pad = (jnp.zeros((fip, fop), jnp.float32)
                     .at[:fi, :fo].set(w).astype(jnp.bfloat16))
            b_pad = jnp.zeros((1, fop), jnp.float32).at[0, :fo].set(b)
            if i < self.n_layers:
                self.hidden_params += [w_pad, b_pad]
                if i > 0:   # hidden layers > 0 carry BatchNorm (gamma=1, beta=0)
                    self.hidden_params += [jnp.ones((1, fop), jnp.float32),
                                           jnp.zeros((1, fop), jnp.float32)]
            else:
                self.fc_w, self.fc_b = w_pad, b_pad

        self._hidden_kernel = _make_hidden_kernel(self.n_layers)

    # ---------------- VMEM budgeting (cap 48 MiB for v7x headroom) ---------

    def _hidden_vmem_bytes(self, batch):
        param_b = sum(int(np.prod(p.shape)) * p.dtype.itemsize
                      for p in self.hidden_params)
        widest = max(self.hidden_widths_p) if self.hidden_widths_p else self.in0_p
        act_b = 3 * batch * widest * 4                # a few live f32 activations
        io_b = batch * (self.in0_p + self.d_last_p) * 2
        est = param_b + act_b + io_b + (4 << 20)
        return int(min(48 << 20, max(32 << 20, est)))

    def _fc_vmem_bytes(self, tb, tn, fc_buffers):
        bufs = fc_buffers if fc_buffers is not None else 2
        est = (2 * tb * self.d_last_p * 2                      # h tile (bf16)
               + bufs * (self.d_last_p * tn * 2 + tn * 4)      # fc w/b tiles
               + 2 * tb * tn * 4                               # out tile (f32)
               + (4 << 20))
        return int(min(48 << 20, max(32 << 20, est)))

    # ---------------- forward ---------------------------------------------

    def __call__(self, x, label, *, max_tn=None):
        # Glue: concat latent + class conditioning, cast to bf16 (first matmul
        # consumes bf16 anyway; halves the x DMA), zero-pad the feature axis.
        xin = jnp.concatenate([x.astype(jnp.float32),
                               label.astype(jnp.float32)], axis=1)
        xin = xin.astype(jnp.bfloat16)
        batch = xin.shape[0]
        pad = self.in0_p - xin.shape[1]
        if pad:
            xin = jnp.pad(xin, ((0, 0), (0, pad)))

        # ---- Stage 1: hidden MLP + folded BN over the FULL batch ----------
        # No grid: every constant operand lives in VMEM exactly once (no
        # double-buffering), and BatchNorm statistics see the whole batch.
        # NOTE: batch is never padded here, so BN stats are exact.
        h = pl.pallas_call(
            self._hidden_kernel,
            out_shape=jax.ShapeDtypeStruct((batch, self.d_last_p), jnp.bfloat16),
            compiler_params=pltpu.CompilerParams(
                vmem_limit_bytes=self._hidden_vmem_bytes(batch)),
        )(xin, *self.hidden_params)

        # ---- Stage 2: fc + tanh, parallel grid over (batch, columns) ------
        # Batch tile: keep small batches whole; tile big batches at 256 rows.
        if batch > 256 and batch % 256 == 0:
            tb = 256
        else:
            tb = batch
        n_btiles = batch // tb

        # Column tile: whole padded width when the fc comfortably fits in
        # VMEM (single grid step), otherwise the largest of {2048,1024,512}
        # that divides img_flat_p (always a multiple of 512 by construction).
        single_bytes = (self.d_last_p * self.img_flat_p * 2
                        + 2 * tb * self.img_flat_p * 4
                        + self.img_flat_p * 4)
        if (max_tn is None or self.img_flat_p <= max_tn) and single_bytes <= (12 << 20):
            tn = self.img_flat_p
        else:
            tn = 512
            for cand in (2048, 1024, 512):
                if self.img_flat_p % cand == 0 and (max_tn is None or cand <= max_tn):
                    tn = cand
                    break
        n_col = self.img_flat_p // tn
        # Deeper pipelining for the streamed fc weight/bias when it pays off.
        fc_buffers = min(3, n_col) if n_col >= 2 else None

        def col_spec(shape, idx_map):
            if fc_buffers is not None:
                return pl.BlockSpec(shape, idx_map,
                                    pipeline_mode=pl.Buffered(fc_buffers))
            return pl.BlockSpec(shape, idx_map)

        in_specs = [
            pl.BlockSpec((tb, self.d_last_p), lambda bi, j: (bi, 0)),       # h
            col_spec((self.d_last_p, tn), lambda bi, j: (0, j)),            # fc W tile
            col_spec((1, tn), lambda bi, j: (0, j)),                        # fc b tile
        ]
        out_spec = pl.BlockSpec((tb, tn), lambda bi, j: (bi, j))

        out_flat = pl.pallas_call(
            _fc_kernel,
            out_shape=jax.ShapeDtypeStruct((batch, self.img_flat_p), jnp.float32),
            grid_spec=pltpu.PrefetchScalarGridSpec(
                num_scalar_prefetch=0,
                grid=(n_btiles, n_col),
                in_specs=in_specs,
                out_specs=out_spec,
            ),
            # Fully parallel grid: no cross-step state, so v7x's two
            # TensorCores can split the FLOP-dominant fc stage.
            compiler_params=pltpu.CompilerParams(
                dimension_semantics=("parallel", "parallel"),
                vmem_limit_bytes=self._fc_vmem_bytes(tb, tn, fc_buffers)),
        )(h, self.fc_w, self.fc_b)

        # Glue: drop lane padding and reshape to (N, C, H, W).
        return out_flat[:, :self.img_flat].reshape((batch,) + self.img_shape)


if __name__ == "__main__":
    # Small, module-consistent shapes. img_flat = 3*32*32 = 3072 (already a
    # multiple of 512); d_last_p = 256. The first call takes the single-tile
    # fc path, the second forces 1024-wide column tiles (3 tiles, Buffered(3))
    # to exercise the streamed / parallel-grid path; results must match.
    batch = 8
    img_shape = (3, 32, 32)     # C, H, W  -> img_flat = 3072
    num_class = 10
    dim_latent = 16
    g_dims = (32, 64, 128)

    key = jax.random.PRNGKey(0)
    k_param, k_z, k_lbl = jax.random.split(key, 3)

    gen = Generator(img_shape, num_class, dim_latent, g_dims=g_dims, key=k_param)

    z = jax.random.normal(k_z, (batch, dim_latent), jnp.float32)
    labels = jax.random.randint(k_lbl, (batch,), 0, num_class)
    label_onehot = jax.nn.one_hot(labels, num_class, dtype=jnp.float32)

    img_single = jax.block_until_ready(gen(z, label_onehot))
    img_tiled = jax.block_until_ready(gen(z, label_onehot, max_tn=1024))

    assert img_single.shape == (batch,) + img_shape, img_single.shape
    assert bool(jnp.all(jnp.isfinite(img_single)))
    assert bool(jnp.all(jnp.abs(img_single) <= 1.0))      # tanh output range
    # Column tiling must not change the math.
    assert bool(jnp.allclose(img_single, img_tiled, atol=1e-5, rtol=0))
    print("KERNEL_OK")
</pallas_src>

<mosaic_0001>
module attributes {stable_mosaic.version = 11 : i64} {
  func.func @kernel(%arg0: memref<8x128xbf16, #tpu.memory_space<vmem>>, %arg1: memref<128x128xbf16, #tpu.memory_space<vmem>>, %arg2: memref<1x128xf32, #tpu.memory_space<vmem>>, %arg3: memref<128x128xbf16, #tpu.memory_space<vmem>>, %arg4: memref<1x128xf32, #tpu.memory_space<vmem>>, %arg5: memref<1x128xf32, #tpu.memory_space<vmem>>, %arg6: memref<1x128xf32, #tpu.memory_space<vmem>>, %arg7: memref<128x256xbf16, #tpu.memory_space<vmem>>, %arg8: memref<1x256xf32, #tpu.memory_space<vmem>>, %arg9: memref<1x256xf32, #tpu.memory_space<vmem>>, %arg10: memref<1x256xf32, #tpu.memory_space<vmem>>, %arg11: memref<8x256xbf16, #tpu.memory_space<vmem>>) attributes {dimension_semantics = [], scalar_prefetch = 0 : i64, scratch_operands = 0 : i64, tpu.core_type = #tpu.core_type<tc>} {
    %c0 = arith.constant 0 : index
    %c0_0 = arith.constant 0 : index
    %0 = vector.load %arg0[%c0, %c0_0] : memref<8x128xbf16, #tpu.memory_space<vmem>>, vector<8x128xbf16>
    %c0_1 = arith.constant 0 : index
    %c0_2 = arith.constant 0 : index
    %1 = vector.load %arg1[%c0_1, %c0_2] : memref<128x128xbf16, #tpu.memory_space<vmem>>, vector<128x128xbf16>
    %c0_3 = arith.constant 0 : index
    %c0_4 = arith.constant 0 : index
    %2 = vector.load %arg2[%c0_3, %c0_4] : memref<1x128xf32, #tpu.memory_space<vmem>>, vector<1x128xf32>
    %cst = arith.constant dense<0.000000e+00> : vector<8x128xf32>
    %3 = tpu.matmul %0, %1, %cst {dimension_numbers = #tpu.dot_dimension_numbers<[1], [0], [0], [1], [0, 0, 1, 1], [], []>} : vector<8x128xbf16>, vector<128x128xbf16>, vector<8x128xf32> -> vector<8x128xf32>
    %4 = vector.broadcast %2 : vector<1x128xf32> to vector<8x128xf32>
    %5 = arith.addf %3, %4 : vector<8x128xf32>
    %cst_5 = arith.constant 2.000000e-01 : f32
    %6 = vector.broadcast %cst_5 : f32 to vector<8x128xf32>
    %7 = arith.mulf %6, %5 : vector<8x128xf32>
    %8 = arith.maximumf %5, %7 : vector<8x128xf32>
    %9 = arith.truncf %8 : vector<8x128xf32> to vector<8x128xbf16>
    %c0_6 = arith.constant 0 : index
    %c0_7 = arith.constant 0 : index
    %10 = vector.load %arg3[%c0_6, %c0_7] : memref<128x128xbf16, #tpu.memory_space<vmem>>, vector<128x128xbf16>
    %c0_8 = arith.constant 0 : index
    %c0_9 = arith.constant 0 : index
    %11 = vector.load %arg4[%c0_8, %c0_9] : memref<1x128xf32, #tpu.memory_space<vmem>>, vector<1x128xf32>
    %cst_10 = arith.constant dense<0.000000e+00> : vector<8x128xf32>
    %12 = tpu.matmul %9, %10, %cst_10 {dimension_numbers = #tpu.dot_dimension_numbers<[1], [0], [0], [1], [0, 0, 1, 1], [], []>} : vector<8x128xbf16>, vector<128x128xbf16>, vector<8x128xf32> -> vector<8x128xf32>
    %13 = vector.broadcast %11 : vector<1x128xf32> to vector<8x128xf32>
    %14 = arith.addf %12, %13 : vector<8x128xf32>
    %c0_11 = arith.constant 0 : index
    %c0_12 = arith.constant 0 : index
    %15 = vector.load %arg5[%c0_11, %c0_12] : memref<1x128xf32, #tpu.memory_space<vmem>>, vector<1x128xf32>
    %c0_13 = arith.constant 0 : index
    %c0_14 = arith.constant 0 : index
    %16 = vector.load %arg6[%c0_13, %c0_14] : memref<1x128xf32, #tpu.memory_space<vmem>>, vector<1x128xf32>
    %cst_15 = arith.constant dense<0.000000e+00> : vector<128xf32>
    %17 = vector.multi_reduction <add>, %14, %cst_15 [0] : vector<8x128xf32> to vector<128xf32>
    %18 = vector.shape_cast %17 : vector<128xf32> to vector<1x128xf32>
    %19 = arith.mulf %14, %14 : vector<8x128xf32>
    %cst_16 = arith.constant dense<0.000000e+00> : vector<128xf32>
    %20 = vector.multi_reduction <add>, %19, %cst_16 [0] : vector<8x128xf32> to vector<128xf32>
    %21 = vector.shape_cast %20 : vector<128xf32> to vector<1x128xf32>
    %cst_17 = arith.constant 1.250000e-01 : f32
    %22 = vector.broadcast %cst_17 : f32 to vector<1x128xf32>
    %23 = arith.mulf %18, %22 : vector<1x128xf32>
    %cst_18 = arith.constant 1.250000e-01 : f32
    %24 = vector.broadcast %cst_18 : f32 to vector<1x128xf32>
    %25 = arith.mulf %21, %24 : vector<1x128xf32>
    %26 = arith.mulf %23, %23 : vector<1x128xf32>
    %27 = arith.subf %25, %26 : vector<1x128xf32>
    %cst_19 = arith.constant 8.000000e-01 : f32
    %28 = vector.broadcast %cst_19 : f32 to vector<1x128xf32>
    %29 = arith.addf %27, %28 : vector<1x128xf32>
    %30 = math.rsqrt %29 : vector<1x128xf32>
    %31 = arith.mulf %15, %30 : vector<1x128xf32>
    %32 = arith.mulf %23, %31 : vector<1x128xf32>
    %33 = arith.subf %16, %32 : vector<1x128xf32>
    %34 = vector.broadcast %31 : vector<1x128xf32> to vector<8x128xf32>
    %35 = arith.mulf %14, %34 : vector<8x128xf32>
    %36 = vector.broadcast %33 : vector<1x128xf32> to vector<8x128xf32>
    %37 = arith.addf %35, %36 : vector<8x128xf32>
    %cst_20 = arith.constant 2.000000e-01 : f32
    %38 = vector.broadcast %cst_20 : f32 to vector<8x128xf32>
    %39 = arith.mulf %38, %37 : vector<8x128xf32>
    %40 = arith.maximumf %37, %39 : vector<8x128xf32>
    %41 = arith.truncf %40 : vector<8x128xf32> to vector<8x128xbf16>
    %c0_21 = arith.constant 0 : index
    %c0_22 = arith.constant 0 : index
    %42 = vector.load %arg7[%c0_21, %c0_22] : memref<128x256xbf16, #tpu.memory_space<vmem>>, vector<128x256xbf16>
    %c0_23 = arith.constant 0 : index
    %c0_24 = arith.constant 0 : index
    %43 = vector.load %arg8[%c0_23, %c0_24] : memref<1x256xf32, #tpu.memory_space<vmem>>, vector<1x256xf32>
    %cst_25 = arith.constant dense<0.000000e+00> : vector<8x256xf32>
    %44 = tpu.matmul %41, %42, %cst_25 {dimension_numbers = #tpu.dot_dimension_numbers<[1], [0], [0], [1], [0, 0, 1, 1], [], []>} : vector<8x128xbf16>, vector<128x256xbf16>, vector<8x256xf32> -> vector<8x256xf32>
    %45 = vector.broadcast %43 : vector<1x256xf32> to vector<8x256xf32>
    %46 = arith.addf %44, %45 : vector<8x256xf32>
    %c0_26 = arith.constant 0 : index
    %c0_27 = arith.constant 0 : index
    %47 = vector.load %arg9[%c0_26, %c0_27] : memref<1x256xf32, #tpu.memory_space<vmem>>, vector<1x256xf32>
    %c0_28 = arith.constant 0 : index
    %c0_29 = arith.constant 0 : index
    %48 = vector.load %arg10[%c0_28, %c0_29] : memref<1x256xf32, #tpu.memory_space<vmem>>, vector<1x256xf32>
    %cst_30 = arith.constant dense<0.000000e+00> : vector<256xf32>
    %49 = vector.multi_reduction <add>, %46, %cst_30 [0] : vector<8x256xf32> to vector<256xf32>
    %50 = vector.shape_cast %49 : vector<256xf32> to vector<1x256xf32>
    %51 = arith.mulf %46, %46 : vector<8x256xf32>
    %cst_31 = arith.constant dense<0.000000e+00> : vector<256xf32>
    %52 = vector.multi_reduction <add>, %51, %cst_31 [0] : vector<8x256xf32> to vector<256xf32>
    %53 = vector.shape_cast %52 : vector<256xf32> to vector<1x256xf32>
    %cst_32 = arith.constant 1.250000e-01 : f32
    %54 = vector.broadcast %cst_32 : f32 to vector<1x256xf32>
    %55 = arith.mulf %50, %54 : vector<1x256xf32>
    %cst_33 = arith.constant 1.250000e-01 : f32
    %56 = vector.broadcast %cst_33 : f32 to vector<1x256xf32>
    %57 = arith.mulf %53, %56 : vector<1x256xf32>
    %58 = arith.mulf %55, %55 : vector<1x256xf32>
    %59 = arith.subf %57, %58 : vector<1x256xf32>
    %cst_34 = arith.constant 8.000000e-01 : f32
    %60 = vector.broadcast %cst_34 : f32 to vector<1x256xf32>
    %61 = arith.addf %59, %60 : vector<1x256xf32>
    %62 = math.rsqrt %61 : vector<1x256xf32>
    %63 = arith.mulf %47, %62 : vector<1x256xf32>
    %64 = arith.mulf %55, %63 : vector<1x256xf32>
    %65 = arith.subf %48, %64 : vector<1x256xf32>
    %66 = vector.broadcast %63 : vector<1x256xf32> to vector<8x256xf32>
    %67 = arith.mulf %46, %66 : vector<8x256xf32>
    %68 = vector.broadcast %65 : vector<1x256xf32> to vector<8x256xf32>
    %69 = arith.addf %67, %68 : vector<8x256xf32>
    %cst_35 = arith.constant 2.000000e-01 : f32
    %70 = vector.broadcast %cst_35 : f32 to vector<8x256xf32>
    %71 = arith.mulf %70, %69 : vector<8x256xf32>
    %72 = arith.maximumf %69, %71 : vector<8x256xf32>
    %73 = arith.truncf %72 : vector<8x256xf32> to vector<8x256xbf16>
    %c0_36 = arith.constant 0 : index
    %c0_37 = arith.constant 0 : index
    %74 = vector.load %arg11[%c0_36, %c0_37] : memref<8x256xbf16, #tpu.memory_space<vmem>>, vector<8x256xbf16>
    tpu.vector_store %arg11[%c0_36, %c0_37], %73 {strides = array<i32>} : memref<8x256xbf16, #tpu.memory_space<vmem>>, vector<8x256xbf16>,
    return
  }
}

</mosaic_0001>

<llo_original>
// kernel: tpu_custom_call.1
$region0: #{tpu_custom_call.1}
  #allocation0 [shape = 'u32[]', space=smem, size = 0x4, offset = 0x4, fixed_abs, tag = 'smem constant byte address 0x4 - core index']
  #allocation1 [shape = 'u32[144,128]{1,0:T(1,128)}', space=vmem, size = 0x12000, scoped, tag = 'internal scratch']
  %s0 = inlined_call_operand.hbm [shape: bf16[8,128], index: 0, kind: input, shape index: {}]
  %s1 = inlined_call_operand.hbm [shape: bf16[128,128], index: 1, kind: input, shape index: {}]
  %s2 = inlined_call_operand.vmem [shape: f32[1,128], index: 2, kind: input, shape index: {}]
  %s3 = inlined_call_operand.hbm [shape: bf16[128,128], index: 3, kind: input, shape index: {}]
  %s4 = inlined_call_operand.vmem [shape: f32[1,128], index: 4, kind: input, shape index: {}]
  %s5 = inlined_call_operand.vmem [shape: f32[1,128], index: 5, kind: input, shape index: {}]
  %s6 = inlined_call_operand.vmem [shape: f32[1,128], index: 6, kind: input, shape index: {}]
  %s7 = inlined_call_operand.hbm [shape: bf16[128,256], index: 7, kind: input, shape index: {}]
  %s8 = inlined_call_operand.vmem [shape: f32[1,256], index: 8, kind: input, shape index: {}]
  %s9 = inlined_call_operand.vmem [shape: f32[1,256], index: 9, kind: input, shape index: {}]
  %s10 = inlined_call_operand.vmem [shape: f32[1,256], index: 10, kind: input, shape index: {}]
  %s11 = inlined_call_operand.hbm [shape: bf16[8,256], index: 11, kind: output, shape index: {}]
  %s12 = sld [smem:[#allocation0]]
  $region70: #{tpu_custom_call.1} parent=0
    _
  %s14 = ssub.s32 1, %s12
  %s15 = scalar_select 0, %s14, %s12
  $region1: #{tpu_custom_call.1} parent=0
    #allocation2 [shape = 'u8[2048]{0}', space=vmem, size = 0x800, scoped, tag = 'input window, operand 0, single buffered']
    #allocation3 [shape = 's32[1]{0}', space=sflag, size = 0x4, scoped, tag = 'scoped memory for tpu_custom_call.1']
    #allocation4 [shape = 's32[1]{0}', space=sflag, size = 0x4, scoped, tag = 'scoped memory for tpu_custom_call.1']
    #allocation5 [shape = 'u8[32768]{0}', space=vmem, size = 0x8000, scoped, tag = 'input window, operand 1, single buffered']
    #allocation6 [shape = 's32[1]{0}', space=sflag, size = 0x4, scoped, tag = 'scoped memory for tpu_custom_call.1']
    #allocation7 [shape = 'u8[32768]{0}', space=vmem, size = 0x8000, scoped, tag = 'input window, operand 3, single buffered']
    #allocation8 [shape = 'u8[65536]{0}', space=vmem, size = 0x10000, scoped, tag = 'input window, operand 7, single buffered']
    #allocation9 [shape = 's32[1]{0}', space=sflag, size = 0x4, scoped, tag = 'scoped memory for tpu_custom_call.1']
    #allocation10 [shape = 'u8[4096]{0}', space=vmem, size = 0x1000, scoped, tag = 'output window, operand 0, single buffered']
    %16 = vsyncpa [#allocation3], 0
    %17 = vsyncpa [#allocation6], 0
    %18 = vsyncpa [#allocation9], 0
    %19 = vsyncpa [#allocation4], 0
    // Predicated region
    $region2: #{tpu_custom_call.1} parent=1 // pred_check
      _
    $region3: #{tpu_custom_call.1} parent=1 // pred_check_branch
      %21 = sbr.rel (0) target = $region5
    $region4: #{tpu_custom_call.1} parent=1 // pred_region
      %s23 = ssub.s32 64, 64
      %24 = vsyncadd [#allocation3], %s23
      %s26 = sshll.u32 [#allocation2], 4
      %s27 = int_to_ptr.vmem [resolvable:$true] %s26
      %29 = dma.hbm_to_vmem [thread:$0]  %s0, 64, %s27, [#allocation3]
    $region5: #{tpu_custom_call.1} parent=1 // pred_fallthru
      _
    // Predicated region
    $region6: #{tpu_custom_call.1} parent=1 // pred_check
      _
    $region7: #{tpu_custom_call.1} parent=1 // pred_check_branch
      %31 = sbr.rel (0) target = $region9
    $region8: #{tpu_custom_call.1} parent=1 // pred_region
      %s33 = ssub.s32 1024, 1024
      %34 = vsyncadd [#allocation6], %s33
      %s35 = sshll.u32 [#allocation5], 4
      %s36 = int_to_ptr.vmem [resolvable:$true] %s35
      %41 = dma.hbm_to_vmem [thread:$0]  %s1, 1024, %s36, [#allocation6], 64, 64, 4
    $region9: #{tpu_custom_call.1} parent=1 // pred_fallthru
      _
    // Predicated region
    $region10: #{tpu_custom_call.1} parent=1 // pred_check
      _
    $region11: #{tpu_custom_call.1} parent=1 // pred_check_branch
      %43 = sbr.rel (0) target = $region13
    $region12: #{tpu_custom_call.1} parent=1 // pred_region
      _
    $region13: #{tpu_custom_call.1} parent=1 // pred_fallthru
      _
    // Predicated region
    $region14: #{tpu_custom_call.1} parent=1 // pred_check
      _
    $region15: #{tpu_custom_call.1} parent=1 // pred_check_branch
      %45 = sbr.rel (0) target = $region17
    $region16: #{tpu_custom_call.1} parent=1 // pred_region
      %s47 = ssub.s32 1024, 1024
      %48 = vsyncadd [#allocation6], %s47
      %s49 = sshll.u32 [#allocation7], 4
      %s50 = int_to_ptr.vmem [resolvable:$true] %s49
      %55 = dma.hbm_to_vmem [thread:$0]  %s3, 1024, %s50, [#allocation6], 64, 64, 4
    $region17: #{tpu_custom_call.1} parent=1 // pred_fallthru
      _
    // Predicated region
    $region18: #{tpu_custom_call.1} parent=1 // pred_check
      _
    $region19: #{tpu_custom_call.1} parent=1 // pred_check_branch
      %57 = sbr.rel (0) target = $region21
    $region20: #{tpu_custom_call.1} parent=1 // pred_region
      _
    $region21: #{tpu_custom_call.1} parent=1 // pred_fallthru
      _
    // Predicated region
    $region22: #{tpu_custom_call.1} parent=1 // pred_check
      _
    $region23: #{tpu_custom_call.1} parent=1 // pred_check_branch
      %59 = sbr.rel (0) target = $region25
    $region24: #{tpu_custom_call.1} parent=1 // pred_region
      _
    $region25: #{tpu_custom_call.1} parent=1 // pred_fallthru
      _
    // Predicated region
    $region26: #{tpu_custom_call.1} parent=1 // pred_check
      _
    $region27: #{tpu_custom_call.1} parent=1 // pred_check_branch
      %61 = sbr.rel (0) target = $region29
    $region28: #{tpu_custom_call.1} parent=1 // pred_region
      _
    $region29: #{tpu_custom_call.1} parent=1 // pred_fallthru
      _
    // Predicated region
    $region30: #{tpu_custom_call.1} parent=1 // pred_check
      _
    $region31: #{tpu_custom_call.1} parent=1 // pred_check_branch
      %63 = sbr.rel (0) target = $region33
    $region32: #{tpu_custom_call.1} parent=1 // pred_region
      %s65 = ssub.s32 2048, 2048
      %66 = vsyncadd [#allocation9], %s65
      %s67 = sshll.u32 [#allocation8], 4
      %s68 = int_to_ptr.vmem [resolvable:$true] %s67
      %73 = dma.hbm_to_vmem [thread:$0]  %s7, 2048, %s68, [#allocation9], 128, 128, 8
    $region33: #{tpu_custom_call.1} parent=1 // pred_fallthru
      _
    // Predicated region
    $region34: #{tpu_custom_call.1} parent=1 // pred_check
      _
    $region35: #{tpu_custom_call.1} parent=1 // pred_check_branch
      %75 = sbr.rel (0) target = $region37
    $region36: #{tpu_custom_call.1} parent=1 // pred_region
      _
    $region37: #{tpu_custom_call.1} parent=1 // pred_fallthru
      _
    // Predicated region
    $region38: #{tpu_custom_call.1} parent=1 // pred_check
      _
    $region39: #{tpu_custom_call.1} parent=1 // pred_check_branch
      %77 = sbr.rel (0) target = $region41
    $region40: #{tpu_custom_call.1} parent=1 // pred_region
      _
    $region41: #{tpu_custom_call.1} parent=1 // pred_fallthru
      _
    // Predicated region
    $region42: #{tpu_custom_call.1} parent=1 // pred_check
      _
    $region43: #{tpu_custom_call.1} parent=1 // pred_check_branch
      %79 = sbr.rel (0) target = $region45
    $region44: #{tpu_custom_call.1} parent=1 // pred_region
      _
    $region45: #{tpu_custom_call.1} parent=1 // pred_fallthru
      _
    // Predicated region
    $region46: #{tpu_custom_call.1} parent=1 // pred_check
      _
    $region47: #{tpu_custom_call.1} parent=1 // pred_check_branch
      %81 = sbr.rel (0) target = $region49
    $region48: #{tpu_custom_call.1} parent=1 // pred_region
      %82 = dma.done [#allocation3], 64
    $region49: #{tpu_custom_call.1} parent=1 // pred_fallthru
      _
    // Predicated region
    $region50: #{tpu_custom_call.1} parent=1 // pred_check
      _
    $region51: #{tpu_custom_call.1} parent=1 // pred_check_branch
      %84 = sbr.rel (0) target = $region53
    $region52: #{tpu_custom_call.1} parent=1 // pred_region
      %85 = dma.done [#allocation6], 1024
    $region53: #{tpu_custom_call.1} parent=1 // pred_fallthru
      _
    // Predicated region
    $region54: #{tpu_custom_call.1} parent=1 // pred_check
      _
    $region55: #{tpu_custom_call.1} parent=1 // pred_check_branch
      %87 = sbr.rel (0) target = $region57
    $region56: #{tpu_custom_call.1} parent=1 // pred_region
      %88 = dma.done [#allocation6], 1024
    $region57: #{tpu_custom_call.1} parent=1 // pred_fallthru
      _
    // Predicated region
    $region58: #{tpu_custom_call.1} parent=1 // pred_check
      _
    $region59: #{tpu_custom_call.1} parent=1 // pred_check_branch
      %90 = sbr.rel (0) target = $region61
    $region60: #{tpu_custom_call.1} parent=1 // pred_region
      %91 = dma.done [#allocation9], 2048
    $region61: #{tpu_custom_call.1} parent=1 // pred_fallthru
      _
    %v93 = vld [vmem:[#allocation2] sm:$0xf]
    %v94 = vld [vmem:[#allocation5] sm:$0xf]
    %v95 = vld [vmem:[#allocation5 + $0x4] sm:$0xf]
    %v96 = vld [vmem:[#allocation5 + $0x8] sm:$0xf]
    %v97 = vld [vmem:[#allocation5 + $0xc] sm:$0xf]
    %v98 = vld [vmem:[#allocation5 + $0x10] sm:$0xf]
    %v99 = vld [vmem:[#allocation5 + $0x14] sm:$0xf]
    %v100 = vld [vmem:[#allocation5 + $0x18] sm:$0xf]
    %v101 = vld [vmem:[#allocation5 + $0x1c] sm:$0xf]
    %v102 = vld [vmem:[#allocation5 + $0x20] sm:$0xf]
    %v103 = vld [vmem:[#allocation5 + $0x24] sm:$0xf]
    %v104 = vld [vmem:[#allocation5 + $0x28] sm:$0xf]
    %v105 = vld [vmem:[#allocation5 + $0x2c] sm:$0xf]
    %v106 = vld [vmem:[#allocation5 + $0x30] sm:$0xf]
    %v107 = vld [vmem:[#allocation5 + $0x34] sm:$0xf]
    %v108 = vld [vmem:[#allocation5 + $0x38] sm:$0xf]
    %v109 = vld [vmem:[#allocation5 + $0x3c] sm:$0xf]
    %v110 = vld [vmem:[%s2] sm:$0x1]
    %v112 = vlaneseq
    %v113 = vshrl.u32 %v112, 7
    %v114 = vsub.s32 0, %v113
    %v115 = vrot.slane %v110, %v114
    %v133 = vunpack.c.l.b16 %v94
    %v134 = vunpack.c.l.b16 %v95
    %v135 = vunpack.c.l.b16 %v96
    %v136 = vunpack.c.l.b16 %v97
    %v137 = vunpack.c.l.b16 %v98
    %v138 = vunpack.c.l.b16 %v99
    %v139 = vunpack.c.l.b16 %v100
    %v140 = vunpack.c.l.b16 %v101
    %v141 = vunpack.c.l.b16 %v102
    %v142 = vunpack.c.l.b16 %v103
    %v143 = vunpack.c.l.b16 %v104
    %v144 = vunpack.c.l.b16 %v105
    %v145 = vunpack.c.l.b16 %v106
    %v146 = vunpack.c.l.b16 %v107
    %v147 = vunpack.c.l.b16 %v108
    %v148 = vunpack.c.l.b16 %v109
    %v149 = vpack.c.b16 %v134, %v133
    %v150 = vpack.c.b16 %v136, %v135
    %v151 = vpack.c.b16 %v138, %v137
    %v152 = vpack.c.b16 %v140, %v139
    %v153 = vpack.c.b16 %v142, %v141
    %v154 = vpack.c.b16 %v144, %v143
    %v155 = vpack.c.b16 %v146, %v145
    %v156 = vpack.c.b16 %v148, %v147
    %165 = vmatprep.subr.bf16.mxu0 0
    %166 = vmatpush1.bf16.msra.mxu0 %v149
    %167 = vmatprep.subr.bf16.mxu0 0
    %168 = vmatpush1.bf16.msra.mxu0 %v150
    %169 = vmatprep.subr.bf16.mxu0 0
    %170 = vmatpush1.bf16.msra.mxu0 %v151
    %171 = vmatprep.subr.bf16.mxu0 0
    %172 = vmatpush1.bf16.msra.mxu0 %v152
    %173 = vmatprep.subr.bf16.mxu0 0
    %174 = vmatpush1.bf16.msra.mxu0 %v153
    %175 = vmatprep.subr.bf16.mxu0 0
    %176 = vmatpush1.bf16.msra.mxu0 %v154
    %177 = vmatprep.subr.bf16.mxu0 0
    %178 = vmatpush1.bf16.msra.mxu0 %v155
    %179 = vmatprep.subr.bf16.mxu0 0
    %180 = vmatpush1.bf16.msra.mxu0 %v156
    %181 = vmatprep.subr.bf16.mxu0 0
    %182 = vmatpush1.bf16.msra.mxu0 0
    %183 = vmatprep.subr.bf16.mxu0 0
    %184 = vmatpush1.bf16.msra.mxu0 0
    %185 = vmatprep.subr.bf16.mxu0 0
    %186 = vmatpush1.bf16.msra.mxu0 0
    %187 = vmatprep.subr.bf16.mxu0 0
    %188 = vmatpush1.bf16.msra.mxu0 0
    %189 = vmatprep.subr.bf16.mxu0 0
    %190 = vmatpush1.bf16.msra.mxu0 0
    %191 = vmatprep.subr.bf16.mxu0 0
    %192 = vmatpush1.bf16.msra.mxu0 0
    %193 = vmatprep.subr.bf16.mxu0 0
    %194 = vmatpush1.bf16.msra.mxu0 0
    %195 = vmatprep.subr.bf16.mxu0 0
    %196 = vmatpush1.bf16.msra.mxu0 0
    %197 = vmatprep.mubr.bf16.mxu0 0
    %198 = vmatmul.mubr.bf16.gmra.mrb[0].mxu0 %v93
    %v199 = vpop.f32.mrb[0].mxu0
    %v200 = vadd.f32 %v115, %v199
    %v201 = vpop.f32.mrb[0].mxu0
    %v202 = vpop.f32.mrb[0].mxu0
    %v203 = vpop.f32.mrb[0].mxu0
    %204 = vdwg.mxu0
    %v205 = vmul.f32 %v200, 0.2
    %v206 = vmax.f32 %v200, %v205
    %v207 = vpack.c.bf16 %v206, %v206
    %v208 = vld [vmem:[#allocation7] sm:$0xf]
    %v209 = vld [vmem:[#allocation7 + $0x4] sm:$0xf]
    %v210 = vld [vmem:[#allocation7 + $0x8] sm:$0xf]
    %v211 = vld [vmem:[#allocation7 + $0xc] sm:$0xf]
    %v212 = vld [vmem:[#allocation7 + $0x10] sm:$0xf]
    %v213 = vld [vmem:[#allocation7 + $0x14] sm:$0xf]
    %v214 = vld [vmem:[#allocation7 + $0x18] sm:$0xf]
    %v215 = vld [vmem:[#allocation7 + $0x1c] sm:$0xf]
    %v216 = vld [vmem:[#allocation7 + $0x20] sm:$0xf]
    %v217 = vld [vmem:[#allocation7 + $0x24] sm:$0xf]
    %v218 = vld [vmem:[#allocation7 + $0x28] sm:$0xf]
    %v219 = vld [vmem:[#allocation7 + $0x2c] sm:$0xf]
    %v220 = vld [vmem:[#allocation7 + $0x30] sm:$0xf]
    %v221 = vld [vmem:[#allocation7 + $0x34] sm:$0xf]
    %v222 = vld [vmem:[#allocation7 + $0x38] sm:$0xf]
    %v223 = vld [vmem:[#allocation7 + $0x3c] sm:$0xf]
    %v224 = vld [vmem:[%s4] sm:$0x1]
    %v226 = vlaneseq
    %v227 = vshrl.u32 %v226, 7
    %v228 = vsub.s32 0, %v227
    %v229 = vrot.slane %v224, %v228
    %v247 = vunpack.c.l.b16 %v208
    %v248 = vunpack.c.l.b16 %v209
    %v249 = vunpack.c.l.b16 %v210
    %v250 = vunpack.c.l.b16 %v211
    %v251 = vunpack.c.l.b16 %v212
    %v252 = vunpack.c.l.b16 %v213
    %v253 = vunpack.c.l.b16 %v214
    %v254 = vunpack.c.l.b16 %v215
    %v255 = vunpack.c.l.b16 %v216
    %v256 = vunpack.c.l.b16 %v217
    %v257 = vunpack.c.l.b16 %v218
    %v258 = vunpack.c.l.b16 %v219
    %v259 = vunpack.c.l.b16 %v220
    %v260 = vunpack.c.l.b16 %v221
    %v261 = vunpack.c.l.b16 %v222
    %v262 = vunpack.c.l.b16 %v223
    %v263 = vpack.c.b16 %v248, %v247
    %v264 = vpack.c.b16 %v250, %v249
    %v265 = vpack.c.b16 %v252, %v251
    %v266 = vpack.c.b16 %v254, %v253
    %v267 = vpack.c.b16 %v256, %v255
    %v268 = vpack.c.b16 %v258, %v257
    %v269 = vpack.c.b16 %v260, %v259
    %v270 = vpack.c.b16 %v262, %v261
    %279 = vmatprep.subr.bf16.mxu0 0
    %280 = vmatpush1.bf16.msra.mxu0 %v263
    %281 = vmatprep.subr.bf16.mxu0 0
    %282 = vmatpush1.bf16.msra.mxu0 %v264
    %283 = vmatprep.subr.bf16.mxu0 0
    %284 = vmatpush1.bf16.msra.mxu0 %v265
    %285 = vmatprep.subr.bf16.mxu0 0
    %286 = vmatpush1.bf16.msra.mxu0 %v266
    %287 = vmatprep.subr.bf16.mxu0 0
    %288 = vmatpush1.bf16.msra.mxu0 %v267
    %289 = vmatprep.subr.bf16.mxu0 0
    %290 = vmatpush1.bf16.msra.mxu0 %v268
    %291 = vmatprep.subr.bf16.mxu0 0
    %292 = vmatpush1.bf16.msra.mxu0 %v269
    %293 = vmatprep.subr.bf16.mxu0 0
    %294 = vmatpush1.bf16.msra.mxu0 %v270
    %295 = vmatprep.subr.bf16.mxu0 0
    %296 = vmatpush1.bf16.msra.mxu0 0
    %297 = vmatprep.subr.bf16.mxu0 0
    %298 = vmatpush1.bf16.msra.mxu0 0
    %299 = vmatprep.subr.bf16.mxu0 0
    %300 = vmatpush1.bf16.msra.mxu0 0
    %301 = vmatprep.subr.bf16.mxu0 0
    %302 = vmatpush1.bf16.msra.mxu0 0
    %303 = vmatprep.subr.bf16.mxu0 0
    %304 = vmatpush1.bf16.msra.mxu0 0
    %305 = vmatprep.subr.bf16.mxu0 0
    %306 = vmatpush1.bf16.msra.mxu0 0
    %307 = vmatprep.subr.bf16.mxu0 0
    %308 = vmatpush1.bf16.msra.mxu0 0
    %309 = vmatprep.subr.bf16.mxu0 0
    %310 = vmatpush1.bf16.msra.mxu0 0
    %311 = vmatprep.mubr.bf16.mxu0 0
    %312 = vmatmul.mubr.bf16.gmra.mrb[0].mxu0 %v207
    %v313 = vpop.f32.mrb[0].mxu0
    %v314 = vadd.f32 %v229, %v313
    %v315 = vpop.f32.mrb[0].mxu0
    %v316 = vpop.f32.mrb[0].mxu0
    %v317 = vpop.f32.mrb[0].mxu0
    %318 = vdwg.mxu0
    %v319 = vld [vmem:[%s5] sm:$0x1]
    %v320 = vld [vmem:[%s6] sm:$0x1]
    %v321 = vrot.slane %v314, 4
    %v322 = vadd.f32 %v314, %v321
    %v323 = vrot.slane %v322, 2
    %v324 = vadd.f32 %v322, %v323
    %v325 = vrot.slane %v324, 1
    %v326 = vadd.f32 %v324, %v325
    %v327 = vmul.f32 %v314, %v314
    %v328 = vrot.slane %v327, 4
    %v329 = vadd.f32 %v327, %v328
    %v330 = vrot.slane %v329, 2
    %v331 = vadd.f32 %v329, %v330
    %v332 = vrot.slane %v331, 1
    %v333 = vadd.f32 %v331, %v332
    %v334 = vmul.f32 %v326, 0.125
    %v335 = vmul.f32 %v333, 0.125
    %v336 = vmul.f32 %v334, %v334
    %v337 = vsub.f32 %v335, %v336
    %v338 = vadd.f32 %v337, 0.8
    %v339 = vrsqrt.pop %v338
    %v340 = vmul.f32 %v319, %v339
    %v341 = vmul.f32 %v334, %v340
    %v342 = vsub.f32 %v320, %v341
    %v344 = vlaneseq
    %v345 = vshrl.u32 %v344, 7
    %v346 = vsub.s32 0, %v345
    %v347 = vrot.slane %v340, %v346
    %v349 = vmul.f32 %v314, %v347
    %v351 = vlaneseq
    %v352 = vshrl.u32 %v351, 7
    %v353 = vsub.s32 0, %v352
    %v354 = vrot.slane %v342, %v353
    %v356 = vadd.f32 %v349, %v354
    %v357 = vmul.f32 %v356, 0.2
    %v358 = vmax.f32 %v356, %v357
    %v359 = vpack.c.bf16 %v358, %v358
    %v360 = vld [vmem:[#allocation8] sm:$0xff]
    %v361 = vld [vmem:[#allocation8 + $0x8] sm:$0xff]
    %v362 = vld [vmem:[#allocation8 + $0x10] sm:$0xff]
    %v363 = vld [vmem:[#allocation8 + $0x18] sm:$0xff]
    %v364 = vld [vmem:[#allocation8 + $0x20] sm:$0xff]
    %v365 = vld [vmem:[#allocation8 + $0x28] sm:$0xff]
    %v366 = vld [vmem:[#allocation8 + $0x30] sm:$0xff]
    %v367 = vld [vmem:[#allocation8 + $0x38] sm:$0xff]
    %v368 = vld [vmem:[#allocation8 + $0x40] sm:$0xff]
    %v369 = vld [vmem:[#allocation8 + $0x48] sm:$0xff]
    %v370 = vld [vmem:[#allocation8 + $0x50] sm:$0xff]
    %v371 = vld [vmem:[#allocation8 + $0x58] sm:$0xff]
    %v372 = vld [vmem:[#allocation8 + $0x60] sm:$0xff]
    %v373 = vld [vmem:[#allocation8 + $0x68] sm:$0xff]
    %v374 = vld [vmem:[#allocation8 + $0x70] sm:$0xff]
    %v375 = vld [vmem:[#allocation8 + $0x78] sm:$0xff]
    %v376 = vld [vmem:[%s8] sm:$0x3]
    %v378 = vlaneseq
    %v379 = vshrl.u32 %v378, 7
    %v380 = vsub.s32 0, %v379
    %v381 = vrot.slane %v376, %v380
    %v382 = vlaneseq
    %v383 = vshrl.u32 %v382, 7
    %v384 = vsub.s32 1, %v383
    %v385 = vrot.slane %v376, %v384
    %v404 = vunpack.c.l.b16 %v360
    %v405 = vunpack.c.h.b16 %v360
    %v406 = vunpack.c.l.b16 %v361
    %v407 = vunpack.c.h.b16 %v361
    %v408 = vunpack.c.l.b16 %v362
    %v409 = vunpack.c.h.b16 %v362
    %v410 = vunpack.c.l.b16 %v363
    %v411 = vunpack.c.h.b16 %v363
    %v412 = vunpack.c.l.b16 %v364
    %v413 = vunpack.c.h.b16 %v364
    %v414 = vunpack.c.l.b16 %v365
    %v415 = vunpack.c.h.b16 %v365
    %v416 = vunpack.c.l.b16 %v366
    %v417 = vunpack.c.h.b16 %v366
    %v418 = vunpack.c.l.b16 %v367
    %v419 = vunpack.c.h.b16 %v367
    %v420 = vunpack.c.l.b16 %v368
    %v421 = vunpack.c.h.b16 %v368
    %v422 = vunpack.c.l.b16 %v369
    %v423 = vunpack.c.h.b16 %v369
    %v424 = vunpack.c.l.b16 %v370
    %v425 = vunpack.c.h.b16 %v370
    %v426 = vunpack.c.l.b16 %v371
    %v427 = vunpack.c.h.b16 %v371
    %v428 = vunpack.c.l.b16 %v372
    %v429 = vunpack.c.h.b16 %v372
    %v430 = vunpack.c.l.b16 %v373
    %v431 = vunpack.c.h.b16 %v373
    %v432 = vunpack.c.l.b16 %v374
    %v433 = vunpack.c.h.b16 %v374
    %v434 = vunpack.c.l.b16 %v375
    %v435 = vunpack.c.h.b16 %v375
    %v436 = vpack.c.b16 %v406, %v404
    %v437 = vpack.c.b16 %v407, %v405
    %v438 = vpack.c.b16 %v410, %v408
    %v439 = vpack.c.b16 %v411, %v409
    %v440 = vpack.c.b16 %v414, %v412
    %v441 = vpack.c.b16 %v415, %v413
    %v442 = vpack.c.b16 %v418, %v416
    %v443 = vpack.c.b16 %v419, %v417
    %v444 = vpack.c.b16 %v422, %v420
    %v445 = vpack.c.b16 %v423, %v421
    %v446 = vpack.c.b16 %v426, %v424
    %v447 = vpack.c.b16 %v427, %v425
    %v448 = vpack.c.b16 %v430, %v428
    %v449 = vpack.c.b16 %v431, %v429
    %v450 = vpack.c.b16 %v434, %v432
    %v451 = vpack.c.b16 %v435, %v433
    %468 = vmatprep.subr.bf16.mxu0 %v437
    %469 = vmatpush1.bf16.msra.mxu0 %v436
    %470 = vmatprep.subr.bf16.mxu0 %v439
    %471 = vmatpush1.bf16.msra.mxu0 %v438
    %472 = vmatprep.subr.bf16.mxu0 %v441
    %473 = vmatpush1.bf16.msra.mxu0 %v440
    %474 = vmatprep.subr.bf16.mxu0 %v443
    %475 = vmatpush1.bf16.msra.mxu0 %v442
    %476 = vmatprep.subr.bf16.mxu0 %v445
    %477 = vmatpush1.bf16.msra.mxu0 %v444
    %478 = vmatprep.subr.bf16.mxu0 %v447
    %479 = vmatpush1.bf16.msra.mxu0 %v446
    %480 = vmatprep.subr.bf16.mxu0 %v449
    %481 = vmatpush1.bf16.msra.mxu0 %v448
    %482 = vmatprep.subr.bf16.mxu0 %v451
    %483 = vmatpush1.bf16.msra.mxu0 %v450
    %484 = vmatprep.subr.bf16.mxu0 0
    %485 = vmatpush1.bf16.msra.mxu0 0
    %486 = vmatprep.subr.bf16.mxu0 0
    %487 = vmatpush1.bf16.msra.mxu0 0
    %488 = vmatprep.subr.bf16.mxu0 0
    %489 = vmatpush1.bf16.msra.mxu0 0
    %490 = vmatprep.subr.bf16.mxu0 0
    %491 = vmatpush1.bf16.msra.mxu0 0
    %492 = vmatprep.subr.bf16.mxu0 0
    %493 = vmatpush1.bf16.msra.mxu0 0
    %494 = vmatprep.subr.bf16.mxu0 0
    %495 = vmatpush1.bf16.msra.mxu0 0
    %496 = vmatprep.subr.bf16.mxu0 0
    %497 = vmatpush1.bf16.msra.mxu0 0
    %498 = vmatprep.subr.bf16.mxu0 0
    %499 = vmatpush1.bf16.msra.mxu0 0
    %500 = vmatprep.mubr.bf16.mxu0 0
    %501 = vmatmul.mubr.bf16.gmra.mrb[0].mxu0 %v359
    %v502 = vpop.f32.mrb[0].mxu0
    %v503 = vadd.f32 %v381, %v502
    %v504 = vpop.f32.mrb[0].mxu0
    %v505 = vadd.f32 %v385, %v504
    %v506 = vpop.f32.mrb[0].mxu0
    %v507 = vpop.f32.mrb[0].mxu0
    %508 = vdwg.mxu0
    %v509 = vld [vmem:[%s9] sm:$0x3]
    %v510 = vld [vmem:[%s10] sm:$0x3]
    %v511 = vrot.slane %v503, 4
    %v512 = vadd.f32 %v503, %v511
    %v513 = vrot.slane %v512, 2
    %v514 = vadd.f32 %v512, %v513
    %v515 = vrot.slane %v514, 1
    %v516 = vadd.f32 %v514, %v515
    %v517 = vrot.slane %v505, 4
    %v518 = vadd.f32 %v505, %v517
    %v519 = vrot.slane %v518, 2
    %v520 = vadd.f32 %v518, %v519
    %v521 = vrot.slane %v520, 1
    %v522 = vadd.f32 %v520, %v521
    %v523 = vmul.f32 %v503, %v503
    %v524 = vmul.f32 %v505, %v505
    %v525 = vrot.slane %v523, 4
    %v526 = vadd.f32 %v523, %v525
    %v527 = vrot.slane %v526, 2
    %v528 = vadd.f32 %v526, %v527
    %v529 = vrot.slane %v528, 1
    %v530 = vadd.f32 %v528, %v529
    %v531 = vrot.slane %v524, 4
    %v532 = vadd.f32 %v524, %v531
    %v533 = vrot.slane %v532, 2
    %v534 = vadd.f32 %v532, %v533
    %v535 = vrot.slane %v534, 1
    %v536 = vadd.f32 %v534, %v535
    %v537 = vmul.f32 %v516, 0.125
    %v538 = vmul.f32 %v522, 0.125
    %v539 = vmul.f32 %v530, 0.125
    %v540 = vmul.f32 %v536, 0.125
    %v541 = vmul.f32 %v537, %v537
    %v542 = vmul.f32 %v538, %v538
    %v543 = vsub.f32 %v539, %v541
    %v544 = vsub.f32 %v540, %v542
    %v545 = vadd.f32 %v543, 0.8
    %v546 = vadd.f32 %v544, 0.8
    %v547 = vrsqrt.pop %v545
    %v548 = vrsqrt.pop %v546
    %v551 = vcombine.low %v547, %v548
    %v553 = vunpack.c.l.s4 1966171168
    %v554 = vunpack.c.0.s8 %v553
    %v555 = vlaneseq
    %v556 = vshrl.u32 %v555, 7
    %v557 = vsub.s32 %v554, %v556
    %v558 = vrot.slane %v551, %v557
    %v560 = vunpack.c.l.s4 1966171168
    %v561 = vunpack.c.0.s8 %v560
    %v562 = vlaneseq
    %v563 = vshrl.u32 %v562, 7
    %v564 = vsub.s32 %v561, %v563
    %v565 = vrot.slane %v558, %v564
    %v567 = vmul.f32 %v509, %v565
    %v569 = vlaneseq
    %v570 = vshrl.u32 %v569, 7
    %v571 = vsub.s32 0, %v570
    %v572 = vrot.slane %v567, %v571
    %v573 = vlaneseq
    %v574 = vshrl.u32 %v573, 7
    %v575 = vsub.s32 1, %v574
    %v576 = vrot.slane %v567, %v575
    %v579 = vmul.f32 %v537, %v572
    %v580 = vmul.f32 %v538, %v576
    %v583 = vcombine.low %v579, %v580
    %v585 = vunpack.c.l.s4 1966171168
    %v586 = vunpack.c.0.s8 %v585
    %v587 = vlaneseq
    %v588 = vshrl.u32 %v587, 7
    %v589 = vsub.s32 %v586, %v588
    %v590 = vrot.slane %v583, %v589
    %v592 = vunpack.c.l.s4 1966171168
    %v593 = vunpack.c.0.s8 %v592
    %v594 = vlaneseq
    %v595 = vshrl.u32 %v594, 7
    %v596 = vsub.s32 %v593, %v595
    %v597 = vrot.slane %v590, %v596
    %v599 = vsub.f32 %v510, %v597
    %v600 = vmul.f32 %v503, %v572
    %v601 = vmul.f32 %v505, %v576
    %v603 = vlaneseq
    %v604 = vshrl.u32 %v603, 7
    %v605 = vsub.s32 0, %v604
    %v606 = vrot.slane %v599, %v605
    %v607 = vlaneseq
    %v608 = vshrl.u32 %v607, 7
    %v609 = vsub.s32 1, %v608
    %v610 = vrot.slane %v599, %v609
    %v613 = vadd.f32 %v600, %v606
    %v614 = vadd.f32 %v601, %v610
    %v615 = vmul.f32 %v613, 0.2
    %v616 = vmul.f32 %v614, 0.2
    %v617 = vmax.f32 %v613, %v615
    %v618 = vmax.f32 %v614, %v616
    %v619 = vpack.c.bf16 %v617, %v617
    %v620 = vpack.c.bf16 %v618, %v618
    %v623 = vunpack.c.l.b16 %v619
    %v624 = vunpack.c.l.b16 %v620
    %v625 = vpack.c.b16 %v624, %v623
    %627 = vst [vmem:[#allocation10] sm:$0xff] %v625
    // Predicated region
    $region62: #{tpu_custom_call.1} parent=1 // pred_check
      _
    $region63: #{tpu_custom_call.1} parent=1 // pred_check_branch
      %629 = sbr.rel (0) target = $region65
    $region64: #{tpu_custom_call.1} parent=1 // pred_region
      %s631 = ssub.s32 128, 128
      %632 = vsyncadd [#allocation4], %s631
      %s634 = sshll.u32 [#allocation10], 4
      %s635 = int_to_ptr.vmem [resolvable:$true] %s634
      %637 = dma.vmem_to_hbm [thread:$0]  %s635, 128, %s11, [#allocation4]
    $region65: #{tpu_custom_call.1} parent=1 // pred_fallthru
      _
    // Predicated region
    $region66: #{tpu_custom_call.1} parent=1 // pred_check
      _
    $region67: #{tpu_custom_call.1} parent=1 // pred_check_branch
      %639 = sbr.rel (0) target = $region69
    $region68: #{tpu_custom_call.1} parent=1 // pred_region
      %640 = dma.done [#allocation4], 128
    $region69: #{tpu_custom_call.1} parent=1 // pred_fallthru
      _
    %641 = vsyncpa [#allocation3], 1
    %642 = vsyncpa [#allocation6], 1
    %643 = vsyncpa [#allocation9], 1
    %644 = vsyncpa [#allocation4], 1

</llo_original>
